<compile_context>
chip_gen: v6e
topology: v6e:2x2x1
jax: 0.10.0
libtpu: 0.0.40
codegen_flags: <defaults>
</compile_context>

<pallas_src>
import jax
import jax.numpy as jnp
from jax.experimental import pallas as pl
from jax.experimental.pallas import tpu as pltpu


def beto_head_kernel(hid_ref, w_ref, b_ref, out_ref):
    # hid_ref: (TB, S*D)  bf16    flattened hidden states for TB batch rows
    # w_ref  : (S*D, N)   bf16    fused weight  W[s*D + d, n] = w1[s] * wc[d, n]
    # b_ref  : (1, N)     f32     fused bias    bc[n] + b1 * sum_d wc[d, n]
    # out_ref: (TB, N)    f32
    acc = jnp.dot(hid_ref[...], w_ref[...], preferred_element_type=jnp.float32)
    out_ref[...] = (acc + b_ref[...]).astype(out_ref.dtype)


def _round_up(x, m):
    return ((x + m - 1) // m) * m


def _pick_tb(B, SD, itemsize):
    """Batch tile: multiple of 8, hidden buffer <= ~8 MiB, >=2 grid steps if possible."""
    per_row = SD * itemsize
    tb = max(8, (int((8 << 20) // per_row) // 8) * 8)   # <= ~8 MiB per pipelined buffer
    tb = min(tb, 256)
    if tb >= 128:
        tb = (tb // 128) * 128                          # nicer alignment, less tail pad
    bp8 = _round_up(B, 8)
    tb = min(tb, bp8)
    # Keep at least 2 grid steps when the batch allows (v7x has 2 TensorCores).
    if bp8 >= 16 and _round_up(B, tb) // tb < 2:
        tb = max(8, _round_up(bp8 // 2, 8))
    return tb


def beto_head(hidden, params, *, compute_dtype=jnp.bfloat16):
    """hidden: (B, S=40, D) BERT last_hidden_state.  Returns (B, n_classes) f32."""
    B, S, D = hidden.shape
    SD = S * D

    w1 = params["w1"].reshape(S).astype(jnp.float32)        # (S,)   fc1 weight
    b1 = params["b1"].reshape(()).astype(jnp.float32)       # ()     fc1 bias
    wc = params["wc"].astype(jnp.float32)                    # (D, N) classifier weight (in, out)
    bc = params["bc"].reshape(1, -1).astype(jnp.float32)     # (1, N) classifier bias
    N = wc.shape[1]

    # Fuse fc1 + classifier (f32 folds, then cast weight to the compute dtype).
    w_fused = (w1[:, None, None] * wc[None, :, :]).reshape(SD, N).astype(compute_dtype)
    b_fused = bc + b1 * jnp.sum(wc, axis=0, keepdims=True)   # (1, N) f32
    # TODO(synk): nn.Dropout(p=0.05) is identity at inference; training-mode
    # stochastic dropout is not implemented here.

    hid2 = hidden.reshape(B, SD).astype(compute_dtype)

    itemsize = jnp.dtype(compute_dtype).itemsize
    TB = _pick_tb(B, SD, itemsize)
    Bp = _round_up(B, TB)
    if Bp != B:
        hid2 = jnp.pad(hid2, ((0, Bp - B), (0, 0)))

    grid = (Bp // TB,)

    # VMEM budget (account for lane padding of the narrow N axis).
    n_pad = _round_up(N, 128)
    need = (2 * TB * SD * itemsize            # double-buffered hidden tiles
            + 2 * SD * n_pad * itemsize       # fused weight (resident, assume 2 bufs)
            + 2 * TB * n_pad * 4              # output tiles
            + (2 << 20))                      # headroom
    vmem_limit = int(min(max(need, 32 << 20), 48 << 20))

    flops = 2 * Bp * SD * N
    bytes_accessed = (hid2.size * itemsize + w_fused.size * itemsize
                      + b_fused.size * 4 + Bp * N * 4)

    out = pl.pallas_call(
        beto_head_kernel,
        out_shape=jax.ShapeDtypeStruct((Bp, N), jnp.float32),
        grid=grid,
        in_specs=[
            # TB batch rows per grid step.
            pl.BlockSpec((TB, SD), lambda b: (b, 0)),
            # Weights/bias: constant block index -> stay VMEM-resident across the grid.
            pl.BlockSpec((SD, N), lambda b: (0, 0)),
            pl.BlockSpec((1, N), lambda b: (0, 0)),
        ],
        out_specs=pl.BlockSpec((TB, N), lambda b: (b, 0)),
        compiler_params=pltpu.CompilerParams(
            dimension_semantics=("parallel",),
            vmem_limit_bytes=vmem_limit),
        cost_estimate=pl.CostEstimate(flops=flops, transcendentals=0,
                                      bytes_accessed=bytes_accessed),
    )(hid2, w_fused, b_fused)

    return out[:B]


def ref_forward(hidden, p):
    """Pure-JAX f32 reference of the PyTorch forward (eval mode)."""
    cls = jnp.einsum("bsd,s->bd", hidden, p["w1"][0]) + p["b1"].reshape(())
    return cls @ p["wc"] + p["bc"][0]


if __name__ == "__main__":
    B = 10           # batch (not a multiple of 8 -> exercises tail padding)
    S = 40           # token count (fixed by fc1 = nn.Linear(40, 1))
    D = 32           # encoding_dimension (small test value)
    N_CLASSES = 4

    key = jax.random.PRNGKey(0)
    k = jax.random.split(key, 5)

    hidden = jax.random.normal(k[0], (B, S, D), jnp.float32)
    params = {
        # fc1 = nn.Linear(40, 1): weight (1, 40), bias as (1, 1)
        "w1": jax.random.normal(k[1], (1, S), jnp.float32) * 0.05,
        "b1": jax.random.normal(k[2], (1, 1), jnp.float32) * 0.05,
        # classifier = nn.Linear(D, n_classes): weight stored transposed (D, N)
        "wc": jax.random.normal(k[3], (D, N_CLASSES), jnp.float32) * 0.05,
        "bc": jax.random.normal(k[4], (1, N_CLASSES), jnp.float32) * 0.05,
    }

    out = jax.block_until_ready(beto_head(hidden, params))
    ref = ref_forward(hidden, params)

    assert out.shape == (B, N_CLASSES), out.shape
    # bf16 inputs with f32 accumulation -> loosened tolerance vs the f32 reference.
    assert jnp.allclose(out, ref, atol=2e-2, rtol=2e-2), (out, ref)

    print("KERNEL_OK")
</pallas_src>

<mosaic_0001>
module attributes {stable_mosaic.version = 11 : i64} {
  func.func @beto_head_kernel(%arg0: i32, %arg1: memref<8x1280xbf16, #tpu.memory_space<vmem>>, %arg2: memref<1280x4xbf16, #tpu.memory_space<vmem>>, %arg3: memref<1x4xf32, #tpu.memory_space<vmem>>, %arg4: memref<8x4xf32, #tpu.memory_space<vmem>>) attributes {dimension_semantics = [#tpu.dimension_semantics<parallel>], iteration_bounds = array<i64: 2>, scalar_prefetch = 0 : i64, scratch_operands = 0 : i64, tpu.core_type = #tpu.core_type<tc>, window_params = [{transform_indices = @transform_0, window_bounds = array<i64: 8, 1280>}, {pipeline_mode = #tpu.pipeline_mode<synchronous>, transform_indices = @transform_1, window_bounds = array<i64: 1280, 4>}, {pipeline_mode = #tpu.pipeline_mode<synchronous>, transform_indices = @transform_2, window_bounds = array<i64: 1, 4>}, {transform_indices = @transform_3, window_bounds = array<i64: 8, 4>}]} {
    %c0 = arith.constant 0 : index
    %c0_0 = arith.constant 0 : index
    %0 = vector.load %arg1[%c0, %c0_0] : memref<8x1280xbf16, #tpu.memory_space<vmem>>, vector<8x1280xbf16>
    %c0_1 = arith.constant 0 : index
    %c0_2 = arith.constant 0 : index
    %1 = vector.load %arg2[%c0_1, %c0_2] : memref<1280x4xbf16, #tpu.memory_space<vmem>>, vector<1280x4xbf16>
    %cst = arith.constant dense<0.000000e+00> : vector<8x4xf32>
    %2 = tpu.matmul %0, %1, %cst {dimension_numbers = #tpu.dot_dimension_numbers<[1], [0], [0], [1], [0, 0, 1, 1], [], []>} : vector<8x1280xbf16>, vector<1280x4xbf16>, vector<8x4xf32> -> vector<8x4xf32>
    %c0_3 = arith.constant 0 : index
    %c0_4 = arith.constant 0 : index
    %3 = vector.load %arg3[%c0_3, %c0_4] : memref<1x4xf32, #tpu.memory_space<vmem>>, vector<1x4xf32>
    %4 = vector.broadcast %3 : vector<1x4xf32> to vector<8x4xf32>
    %5 = arith.addf %2, %4 : vector<8x4xf32>
    %c0_5 = arith.constant 0 : index
    %c0_6 = arith.constant 0 : index
    %6 = vector.load %arg4[%c0_5, %c0_6] : memref<8x4xf32, #tpu.memory_space<vmem>>, vector<8x4xf32>
    tpu.vector_store %arg4[%c0_5, %c0_6], %5 {strides = array<i32>} : memref<8x4xf32, #tpu.memory_space<vmem>>, vector<8x4xf32>,
    return
  }
  func.func @transform_0(%arg0: i32) -> (i32, i32) {
    %c0_i32 = arith.constant 0 : i32
    %c0_i32_0 = arith.constant 0 : i32
    return %arg0, %c0_i32 : i32, i32
  }
  func.func @transform_1(%arg0: i32) -> (i32, i32) {
    %c0_i32 = arith.constant 0 : i32
    %c0_i32_0 = arith.constant 0 : i32
    %c0_i32_1 = arith.constant 0 : i32
    return %c0_i32, %c0_i32_0 : i32, i32
  }
  func.func @transform_2(%arg0: i32) -> (i32, i32) {
    %c0_i32 = arith.constant 0 : i32
    %c0_i32_0 = arith.constant 0 : i32
    %c0_i32_1 = arith.constant 0 : i32
    return %c0_i32, %c0_i32_0 : i32, i32
  }
  func.func @transform_3(%arg0: i32) -> (i32, i32) {
    %c0_i32 = arith.constant 0 : i32
    %c0_i32_0 = arith.constant 0 : i32
    return %arg0, %c0_i32 : i32, i32
  }
}

</mosaic_0001>

<llo_original>
// kernel: tpu_custom_call.1
$region0: #{tpu_custom_call.1}
  #allocation0 [shape = 'u32[]', space=smem, size = 0x4, offset = 0x4, fixed_abs, tag = 'smem constant byte address 0x4 - core index']
  #allocation1 [shape = 'u32[144,128]{1,0:T(1,128)}', space=vmem, size = 0x12000, scoped, tag = 'internal scratch']
  %s0 = inlined_call_operand.vmem [shape: bf16[16,1280], index: 0, kind: input, shape index: {}]
  %s1 = inlined_call_operand.vmem [shape: bf16[1280,4], index: 1, kind: input, shape index: {}]
  %s2 = inlined_call_operand.vmem [shape: f32[1,4], index: 2, kind: input, shape index: {}]
  %s3 = inlined_call_operand.vmem [shape: f32[16,4], index: 3, kind: output, shape index: {}]
  %s4 = sld [smem:[#allocation0]]
  $region45: #{tpu_custom_call.1} parent=0
    _
  %s6 = ssub.s32 1, %s4
  %s7 = scalar_select 0, %s6, %s4
  loop: start=0, step=1, limit=4
  $region2: #{tpu_custom_call.1} parent=0 // loop_pre_header
    _
  $region3: #{tpu_custom_call.1} parent=0 // loop_header
    %s9 = sphi 0, %s13
    %p10 = scmp.ge.s32.totalorder %s9, 4
    %s19 = sphi 0, %s21
    %s22 = sphi 0, %s19
    %s23 = sphi 0, %s22
    %s39 = sphi 0, %s23
    %s43 = sphi 0, %s43
    %s45 = sphi 0, %s43
    %s46 = sphi 0, %s45
    %s60 = sphi 0, %s46
    %s64 = sphi 0, %s64
    %s66 = sphi 0, %s64
    %s67 = sphi 0, %s66
    %s81 = sphi 0, %s67
    %s87 = sphi 0, %s89
    %s90 = sphi 0, %s87
    %s91 = sphi 0, %s90
    %s107 = sphi 0, %s91
  $region4: #{tpu_custom_call.1} parent=0 // loop_header_branch
    %12 = sbr.rel (%p10) target = $region8
  $region5: #{tpu_custom_call.1} parent=0 // loop_body
    %s14 = ssub.s32 %s9, 1
    %s15 = ssub.s32 %s9, 2
    %s16 = sadd.s32 %s9, 1
    %s17 = ssub.s32 %s9, %s16
    %p18 = scmp.eq.s32.totalorder %s17, 0
    %s20 = sadd.s32 %s19, 1
    %s21 = scalar_select %p18, %s19, %s20
    %p24 = pneg %p18
    %p25 = scmp.eq.s32.totalorder %s9, 1
    %p26 = por %p24, %p25
    %p27 = scmp.ne.s32.totalorder %s19, %s22
    %p28 = scmp.eq.s32.totalorder %s9, 0
    %p29 = por %p27, %p28
    %p30 = scmp.ne.s32.totalorder %s19, %s22
    %p31 = scmp.eq.s32.totalorder %s14, 1
    %p32 = por %p30, %p31
    %p33 = scmp.ne.s32.totalorder %s22, %s23
    %p34 = scmp.eq.s32.totalorder %s14, 0
    %p35 = por %p33, %p34
    %p36 = scmp.ne.s32.totalorder %s22, %s23
    %p37 = scmp.eq.s32.totalorder %s15, 1
    %p38 = por %p36, %p37
    %p40 = scmp.ne.s32.totalorder %s23, %s39
    %p41 = scmp.eq.s32.totalorder %s15, 0
    %p42 = por %p40, %p41
    %s44 = sadd.s32 %s43, 1
    %p47 = scmp.eq.s32.totalorder %s9, 1
    %p48 = scmp.ne.s32.totalorder %s43, %s45
    %p49 = scmp.eq.s32.totalorder %s9, 0
    %p50 = por %p48, %p49
    %p51 = scmp.ne.s32.totalorder %s43, %s45
    %p52 = scmp.eq.s32.totalorder %s14, 1
    %p53 = por %p51, %p52
    %p54 = scmp.ne.s32.totalorder %s45, %s46
    %p55 = scmp.eq.s32.totalorder %s14, 0
    %p56 = por %p54, %p55
    %p57 = scmp.ne.s32.totalorder %s45, %s46
    %p58 = scmp.eq.s32.totalorder %s15, 1
    %p59 = por %p57, %p58
    %p61 = scmp.ne.s32.totalorder %s46, %s60
    %p62 = scmp.eq.s32.totalorder %s15, 0
    %p63 = por %p61, %p62
    %s65 = sadd.s32 %s64, 1
    %p68 = scmp.eq.s32.totalorder %s9, 1
    %p69 = scmp.ne.s32.totalorder %s64, %s66
    %p70 = scmp.eq.s32.totalorder %s9, 0
    %p71 = por %p69, %p70
    %p72 = scmp.ne.s32.totalorder %s64, %s66
    %p73 = scmp.eq.s32.totalorder %s14, 1
    %p74 = por %p72, %p73
    %p75 = scmp.ne.s32.totalorder %s66, %s67
    %p76 = scmp.eq.s32.totalorder %s14, 0
    %p77 = por %p75, %p76
    %p78 = scmp.ne.s32.totalorder %s66, %s67
    %p79 = scmp.eq.s32.totalorder %s15, 1
    %p80 = por %p78, %p79
    %p82 = scmp.ne.s32.totalorder %s67, %s81
    %p83 = scmp.eq.s32.totalorder %s15, 0
    %p84 = por %p82, %p83
    %s85 = ssub.s32 %s9, %s16
    %p86 = scmp.eq.s32.totalorder %s85, 0
    %s88 = sadd.s32 %s87, 1
    %s89 = scalar_select %p86, %s87, %s88
    %p92 = pneg %p86
    %p93 = scmp.eq.s32.totalorder %s9, 1
    %p94 = por %p92, %p93
    %p95 = scmp.ne.s32.totalorder %s87, %s90
    %p96 = scmp.eq.s32.totalorder %s9, 0
    %p97 = por %p95, %p96
    %p98 = scmp.ne.s32.totalorder %s87, %s90
    %p99 = scmp.eq.s32.totalorder %s14, 1
    %p100 = por %p98, %p99
    %p101 = scmp.ne.s32.totalorder %s90, %s91
    %p102 = scmp.eq.s32.totalorder %s14, 0
    %p103 = por %p101, %p102
    %p104 = scmp.ne.s32.totalorder %s90, %s91
    %p105 = scmp.eq.s32.totalorder %s15, 1
    %p106 = por %p104, %p105
    %p108 = scmp.ne.s32.totalorder %s91, %s107
    %p109 = scmp.eq.s32.totalorder %s15, 0
    %p110 = por %p108, %p109
    %p111 = scmp.le.s32.totalorder 1, %s9
    %p112 = scmp.lt.s32.totalorder %s9, 3
    %p113 = pnand %p111, %p112
    %p114 = pneg %p113
    // Predicated region
    $region9: #{tpu_custom_call.1} parent=5 // pred_check
      _
    $region10: #{tpu_custom_call.1} parent=5 // pred_check_branch
      %116 = sbr.rel (%p113) target = $region12
    $region11: #{tpu_custom_call.1} parent=5 // pred_region
      %s117 = ssub.s32 %s9, 1
      // Predicated region
      $region13: #{tpu_custom_call.1} parent=11 // pred_check
        %p118 = pneg %p56
      $region14: #{tpu_custom_call.1} parent=11 // pred_check_branch
        %120 = sbr.rel (%p118) target = $region16
      $region15: #{tpu_custom_call.1} parent=11 // pred_region
        _
      $region16: #{tpu_custom_call.1} parent=11 // pred_fallthru
        _
      // Predicated region
      $region17: #{tpu_custom_call.1} parent=11 // pred_check
        %p121 = pneg %p77
      $region18: #{tpu_custom_call.1} parent=11 // pred_check_branch
        %123 = sbr.rel (%p121) target = $region20
      $region19: #{tpu_custom_call.1} parent=11 // pred_region
        _
      $region20: #{tpu_custom_call.1} parent=11 // pred_fallthru
        _
    $region12: #{tpu_custom_call.1} parent=5 // pred_fallthru
      _
    %p124 = scmp.lt.s32.totalorder %s9, 2
    // Predicated region
    $region21: #{tpu_custom_call.1} parent=5 // pred_check
      %p125 = pneg %p124
    $region22: #{tpu_custom_call.1} parent=5 // pred_check_branch
      %127 = sbr.rel (%p125) target = $region24
    $region23: #{tpu_custom_call.1} parent=5 // pred_region
      // Predicated region
      $region25: #{tpu_custom_call.1} parent=23 // pred_check
        %p128 = pneg %p29
      $region26: #{tpu_custom_call.1} parent=23 // pred_check_branch
        %130 = sbr.rel (%p128) target = $region28
      $region27: #{tpu_custom_call.1} parent=23 // pred_region
        %p131 = scmp.lt.s32.totalorder %s9, 1
        %s132 = scalar_select %p131, %s9, 1
        %s133 = smul.addr %s132, 10
        %s134 = smul.addr %s133, 4
        %s135 = scalar_lea.vmem %s0, %s134
      $region28: #{tpu_custom_call.1} parent=23 // pred_fallthru
        _
    $region24: #{tpu_custom_call.1} parent=5 // pred_fallthru
      _
    %p136 = scmp.le.s32.totalorder 1, %s9
    %p137 = scmp.lt.s32.totalorder %s9, 3
    %p138 = pnand %p136, %p137
    %p139 = pneg %p138
    // Predicated region
    $region29: #{tpu_custom_call.1} parent=5 // pred_check
      _
    $region30: #{tpu_custom_call.1} parent=5 // pred_check_branch
      %141 = sbr.rel (%p138) target = $region32
    $region31: #{tpu_custom_call.1} parent=5 // pred_region
      %s142 = ssub.s32 %s9, 1
      %p143 = scmp.lt.s32.totalorder %s14, 1
      %s144 = scalar_select %p143, %s14, 1
      %s145 = smul.addr %s144, 10
      %s146 = smul.addr %s145, 4
      %s147 = scalar_lea.vmem %s0, %s146
      %p148 = pneg %p35
      %p149 = pneg %p32
      %p150 = pneg %p56
      %p151 = pneg %p53
      %p152 = pneg %p77
      %p153 = pneg %p74
      %p154 = pneg %p103
      %p155 = pneg %p100
      %p156 = scmp.lt.s32.totalorder %s14, 1
      %s157 = scalar_select %p156, %s14, 1
      %s158 = smul.addr %s157, 8
      %s159 = scalar_lea.vmem %s3, %s158
      %p160 = scmp.lt.s32.totalorder %s14, 1
      %s161 = scalar_select %p160, %s14, 1
      %s162 = smul.addr %s161, 10
      %s163 = smul.addr %s162, 4
      %s164 = scalar_lea.vmem %s0, %s163
      %p165 = scmp.lt.s32.totalorder %s14, 1
      %s166 = scalar_select %p165, %s14, 1
      %s167 = smul.addr %s166, 8
      %s168 = scalar_lea.vmem %s3, %s167
      %v170 = vld [vmem:[%s164] sm:$0xff]
      %v171 = vld [vmem:[%s164 + $0x8] sm:$0xff]
      %v172 = vld [vmem:[%s164 + $0x10] sm:$0xff]
      %v173 = vld [vmem:[%s164 + $0x18] sm:$0xff]
      %v174 = vld [vmem:[%s164 + $0x20] sm:$0xff]
      %v175 = vld [vmem:[%s1] sm:$0xf]
      %v176 = vld [vmem:[%s1 + $0x4] sm:$0xf]
      %v177 = vld [vmem:[%s1 + $0x8] sm:$0xf]
      %v178 = vld [vmem:[%s1 + $0xc] sm:$0xf]
      %v179 = vld [vmem:[%s1 + $0x10] sm:$0xf]
      %v180 = vld [vmem:[%s1 + $0x14] sm:$0xf]
      %v181 = vld [vmem:[%s1 + $0x18] sm:$0xf]
      %v182 = vld [vmem:[%s1 + $0x1c] sm:$0xf]
      %v183 = vld [vmem:[%s1 + $0x20] sm:$0xf]
      %v184 = vld [vmem:[%s1 + $0x24] sm:$0xf]
      %v185 = vld [vmem:[%s1 + $0x28] sm:$0xf]
      %v186 = vld [vmem:[%s1 + $0x2c] sm:$0xf]
      %v187 = vld [vmem:[%s1 + $0x30] sm:$0xf]
      %v188 = vld [vmem:[%s1 + $0x34] sm:$0xf]
      %v189 = vld [vmem:[%s1 + $0x38] sm:$0xf]
      %v190 = vld [vmem:[%s1 + $0x3c] sm:$0xf]
      %v191 = vld [vmem:[%s1 + $0x40] sm:$0xf]
      %v192 = vld [vmem:[%s1 + $0x44] sm:$0xf]
      %v193 = vld [vmem:[%s1 + $0x48] sm:$0xf]
      %v194 = vld [vmem:[%s1 + $0x4c] sm:$0xf]
      %v195 = vld [vmem:[%s1 + $0x50] sm:$0xf]
      %v196 = vld [vmem:[%s1 + $0x54] sm:$0xf]
      %v197 = vld [vmem:[%s1 + $0x58] sm:$0xf]
      %v198 = vld [vmem:[%s1 + $0x5c] sm:$0xf]
      %v199 = vld [vmem:[%s1 + $0x60] sm:$0xf]
      %v200 = vld [vmem:[%s1 + $0x64] sm:$0xf]
      %v201 = vld [vmem:[%s1 + $0x68] sm:$0xf]
      %v202 = vld [vmem:[%s1 + $0x6c] sm:$0xf]
      %v203 = vld [vmem:[%s1 + $0x70] sm:$0xf]
      %v204 = vld [vmem:[%s1 + $0x74] sm:$0xf]
      %v205 = vld [vmem:[%s1 + $0x78] sm:$0xf]
      %v206 = vld [vmem:[%s1 + $0x7c] sm:$0xf]
      %v207 = vld [vmem:[%s1 + $0x80] sm:$0xf]
      %v208 = vld [vmem:[%s1 + $0x84] sm:$0xf]
      %v209 = vld [vmem:[%s1 + $0x88] sm:$0xf]
      %v210 = vld [vmem:[%s1 + $0x8c] sm:$0xf]
      %v211 = vld [vmem:[%s1 + $0x90] sm:$0xf]
      %v212 = vld [vmem:[%s1 + $0x94] sm:$0xf]
      %v213 = vld [vmem:[%s1 + $0x98] sm:$0xf]
      %v214 = vld [vmem:[%s1 + $0x9c] sm:$0xf]
      %v215 = vld [vmem:[%s1 + $0xa0] sm:$0xf]
      %v216 = vld [vmem:[%s1 + $0xa4] sm:$0xf]
      %v217 = vld [vmem:[%s1 + $0xa8] sm:$0xf]
      %v218 = vld [vmem:[%s1 + $0xac] sm:$0xf]
      %v219 = vld [vmem:[%s1 + $0xb0] sm:$0xf]
      %v220 = vld [vmem:[%s1 + $0xb4] sm:$0xf]
      %v221 = vld [vmem:[%s1 + $0xb8] sm:$0xf]
      %v222 = vld [vmem:[%s1 + $0xbc] sm:$0xf]
      %v223 = vld [vmem:[%s1 + $0xc0] sm:$0xf]
      %v224 = vld [vmem:[%s1 + $0xc4] sm:$0xf]
      %v225 = vld [vmem:[%s1 + $0xc8] sm:$0xf]
      %v226 = vld [vmem:[%s1 + $0xcc] sm:$0xf]
      %v227 = vld [vmem:[%s1 + $0xd0] sm:$0xf]
      %v228 = vld [vmem:[%s1 + $0xd4] sm:$0xf]
      %v229 = vld [vmem:[%s1 + $0xd8] sm:$0xf]
      %v230 = vld [vmem:[%s1 + $0xdc] sm:$0xf]
      %v231 = vld [vmem:[%s1 + $0xe0] sm:$0xf]
      %v232 = vld [vmem:[%s1 + $0xe4] sm:$0xf]
      %v233 = vld [vmem:[%s1 + $0xe8] sm:$0xf]
      %v234 = vld [vmem:[%s1 + $0xec] sm:$0xf]
      %v235 = vld [vmem:[%s1 + $0xf0] sm:$0xf]
      %v236 = vld [vmem:[%s1 + $0xf4] sm:$0xf]
      %v237 = vld [vmem:[%s1 + $0xf8] sm:$0xf]
      %v238 = vld [vmem:[%s1 + $0xfc] sm:$0xf]
      %v239 = vld [vmem:[%s1 + $0x100] sm:$0xf]
      %v240 = vld [vmem:[%s1 + $0x104] sm:$0xf]
      %v241 = vld [vmem:[%s1 + $0x108] sm:$0xf]
      %v242 = vld [vmem:[%s1 + $0x10c] sm:$0xf]
      %v243 = vld [vmem:[%s1 + $0x110] sm:$0xf]
      %v244 = vld [vmem:[%s1 + $0x114] sm:$0xf]
      %v245 = vld [vmem:[%s1 + $0x118] sm:$0xf]
      %v246 = vld [vmem:[%s1 + $0x11c] sm:$0xf]
      %v247 = vld [vmem:[%s1 + $0x120] sm:$0xf]
      %v248 = vld [vmem:[%s1 + $0x124] sm:$0xf]
      %v249 = vld [vmem:[%s1 + $0x128] sm:$0xf]
      %v250 = vld [vmem:[%s1 + $0x12c] sm:$0xf]
      %v251 = vld [vmem:[%s1 + $0x130] sm:$0xf]
      %v252 = vld [vmem:[%s1 + $0x134] sm:$0xf]
      %v253 = vld [vmem:[%s1 + $0x138] sm:$0xf]
      %v254 = vld [vmem:[%s1 + $0x13c] sm:$0xf]
      %v255 = vld [vmem:[%s1 + $0x140] sm:$0xf]
      %v256 = vld [vmem:[%s1 + $0x144] sm:$0xf]
      %v257 = vld [vmem:[%s1 + $0x148] sm:$0xf]
      %v258 = vld [vmem:[%s1 + $0x14c] sm:$0xf]
      %v259 = vld [vmem:[%s1 + $0x150] sm:$0xf]
      %v260 = vld [vmem:[%s1 + $0x154] sm:$0xf]
      %v261 = vld [vmem:[%s1 + $0x158] sm:$0xf]
      %v262 = vld [vmem:[%s1 + $0x15c] sm:$0xf]
      %v263 = vld [vmem:[%s1 + $0x160] sm:$0xf]
      %v264 = vld [vmem:[%s1 + $0x164] sm:$0xf]
      %v265 = vld [vmem:[%s1 + $0x168] sm:$0xf]
      %v266 = vld [vmem:[%s1 + $0x16c] sm:$0xf]
      %v267 = vld [vmem:[%s1 + $0x170] sm:$0xf]
      %v268 = vld [vmem:[%s1 + $0x174] sm:$0xf]
      %v269 = vld [vmem:[%s1 + $0x178] sm:$0xf]
      %v270 = vld [vmem:[%s1 + $0x17c] sm:$0xf]
      %v271 = vld [vmem:[%s1 + $0x180] sm:$0xf]
      %v272 = vld [vmem:[%s1 + $0x184] sm:$0xf]
      %v273 = vld [vmem:[%s1 + $0x188] sm:$0xf]
      %v274 = vld [vmem:[%s1 + $0x18c] sm:$0xf]
      %v275 = vld [vmem:[%s1 + $0x190] sm:$0xf]
      %v276 = vld [vmem:[%s1 + $0x194] sm:$0xf]
      %v277 = vld [vmem:[%s1 + $0x198] sm:$0xf]
      %v278 = vld [vmem:[%s1 + $0x19c] sm:$0xf]
      %v279 = vld [vmem:[%s1 + $0x1a0] sm:$0xf]
      %v280 = vld [vmem:[%s1 + $0x1a4] sm:$0xf]
      %v281 = vld [vmem:[%s1 + $0x1a8] sm:$0xf]
      %v282 = vld [vmem:[%s1 + $0x1ac] sm:$0xf]
      %v283 = vld [vmem:[%s1 + $0x1b0] sm:$0xf]
      %v284 = vld [vmem:[%s1 + $0x1b4] sm:$0xf]
      %v285 = vld [vmem:[%s1 + $0x1b8] sm:$0xf]
      %v286 = vld [vmem:[%s1 + $0x1bc] sm:$0xf]
      %v287 = vld [vmem:[%s1 + $0x1c0] sm:$0xf]
      %v288 = vld [vmem:[%s1 + $0x1c4] sm:$0xf]
      %v289 = vld [vmem:[%s1 + $0x1c8] sm:$0xf]
      %v290 = vld [vmem:[%s1 + $0x1cc] sm:$0xf]
      %v291 = vld [vmem:[%s1 + $0x1d0] sm:$0xf]
      %v292 = vld [vmem:[%s1 + $0x1d4] sm:$0xf]
      %v293 = vld [vmem:[%s1 + $0x1d8] sm:$0xf]
      %v294 = vld [vmem:[%s1 + $0x1dc] sm:$0xf]
      %v295 = vld [vmem:[%s1 + $0x1e0] sm:$0xf]
      %v296 = vld [vmem:[%s1 + $0x1e4] sm:$0xf]
      %v297 = vld [vmem:[%s1 + $0x1e8] sm:$0xf]
      %v298 = vld [vmem:[%s1 + $0x1ec] sm:$0xf]
      %v299 = vld [vmem:[%s1 + $0x1f0] sm:$0xf]
      %v300 = vld [vmem:[%s1 + $0x1f4] sm:$0xf]
      %v301 = vld [vmem:[%s1 + $0x1f8] sm:$0xf]
      %v302 = vld [vmem:[%s1 + $0x1fc] sm:$0xf]
      %v303 = vld [vmem:[%s1 + $0x200] sm:$0xf]
      %v304 = vld [vmem:[%s1 + $0x204] sm:$0xf]
      %v305 = vld [vmem:[%s1 + $0x208] sm:$0xf]
      %v306 = vld [vmem:[%s1 + $0x20c] sm:$0xf]
      %v307 = vld [vmem:[%s1 + $0x210] sm:$0xf]
      %v308 = vld [vmem:[%s1 + $0x214] sm:$0xf]
      %v309 = vld [vmem:[%s1 + $0x218] sm:$0xf]
      %v310 = vld [vmem:[%s1 + $0x21c] sm:$0xf]
      %v311 = vld [vmem:[%s1 + $0x220] sm:$0xf]
      %v312 = vld [vmem:[%s1 + $0x224] sm:$0xf]
      %v313 = vld [vmem:[%s1 + $0x228] sm:$0xf]
      %v314 = vld [vmem:[%s1 + $0x22c] sm:$0xf]
      %v315 = vld [vmem:[%s1 + $0x230] sm:$0xf]
      %v316 = vld [vmem:[%s1 + $0x234] sm:$0xf]
      %v317 = vld [vmem:[%s1 + $0x238] sm:$0xf]
      %v318 = vld [vmem:[%s1 + $0x23c] sm:$0xf]
      %v319 = vld [vmem:[%s1 + $0x240] sm:$0xf]
      %v320 = vld [vmem:[%s1 + $0x244] sm:$0xf]
      %v321 = vld [vmem:[%s1 + $0x248] sm:$0xf]
      %v322 = vld [vmem:[%s1 + $0x24c] sm:$0xf]
      %v323 = vld [vmem:[%s1 + $0x250] sm:$0xf]
      %v324 = vld [vmem:[%s1 + $0x254] sm:$0xf]
      %v325 = vld [vmem:[%s1 + $0x258] sm:$0xf]
      %v326 = vld [vmem:[%s1 + $0x25c] sm:$0xf]
      %v327 = vld [vmem:[%s1 + $0x260] sm:$0xf]
      %v328 = vld [vmem:[%s1 + $0x264] sm:$0xf]
      %v329 = vld [vmem:[%s1 + $0x268] sm:$0xf]
      %v330 = vld [vmem:[%s1 + $0x26c] sm:$0xf]
      %v331 = vld [vmem:[%s1 + $0x270] sm:$0xf]
      %v332 = vld [vmem:[%s1 + $0x274] sm:$0xf]
      %v333 = vld [vmem:[%s1 + $0x278] sm:$0xf]
      %v334 = vld [vmem:[%s1 + $0x27c] sm:$0xf]
      %v335 = vld [vmem:[%s2] sm:$0x1]
      %v337 = vlaneseq
      %v338 = vshrl.u32 %v337, 7
      %v339 = vsub.s32 0, %v338
      %v340 = vrot.slane %v335, %v339
      %v347 = vunpack.c.l.b16 %v170
      %v348 = vunpack.c.h.b16 %v170
      %v349 = vunpack.c.l.b16 %v171
      %v350 = vunpack.c.h.b16 %v171
      %v351 = vunpack.c.l.b16 %v172
      %v352 = vunpack.c.h.b16 %v172
      %v353 = vunpack.c.l.b16 %v173
      %v354 = vunpack.c.h.b16 %v173
      %v355 = vunpack.c.l.b16 %v174
      %v356 = vunpack.c.h.b16 %v174
      %v357 = vpack.c.b16 %v347, %v347
      %v358 = vpack.c.b16 %v348, %v348
      %v359 = vpack.c.b16 %v349, %v349
      %v360 = vpack.c.b16 %v350, %v350
      %v361 = vpack.c.b16 %v351, %v351
      %v362 = vpack.c.b16 %v352, %v352
      %v363 = vpack.c.b16 %v353, %v353
      %v364 = vpack.c.b16 %v354, %v354
      %v365 = vpack.c.b16 %v355, %v355
      %v366 = vpack.c.b16 %v356, %v356
      %v537 = vunpack.c.l.b16 %v175
      %v538 = vunpack.c.l.b16 %v176
      %v539 = vunpack.c.l.b16 %v177
      %v540 = vunpack.c.l.b16 %v178
      %v541 = vunpack.c.l.b16 %v179
      %v542 = vunpack.c.l.b16 %v180
      %v543 = vunpack.c.l.b16 %v181
      %v544 = vunpack.c.l.b16 %v182
      %v545 = vunpack.c.l.b16 %v183
      %v546 = vunpack.c.l.b16 %v184
      %v547 = vunpack.c.l.b16 %v185
      %v548 = vunpack.c.l.b16 %v186
      %v549 = vunpack.c.l.b16 %v187
      %v550 = vunpack.c.l.b16 %v188
      %v551 = vunpack.c.l.b16 %v189
      %v552 = vunpack.c.l.b16 %v190
      %v553 = vunpack.c.l.b16 %v191
      %v554 = vunpack.c.l.b16 %v192
      %v555 = vunpack.c.l.b16 %v193
      %v556 = vunpack.c.l.b16 %v194
      %v557 = vunpack.c.l.b16 %v195
      %v558 = vunpack.c.l.b16 %v196
      %v559 = vunpack.c.l.b16 %v197
      %v560 = vunpack.c.l.b16 %v198
      %v561 = vunpack.c.l.b16 %v199
      %v562 = vunpack.c.l.b16 %v200
      %v563 = vunpack.c.l.b16 %v201
      %v564 = vunpack.c.l.b16 %v202
      %v565 = vunpack.c.l.b16 %v203
      %v566 = vunpack.c.l.b16 %v204
      %v567 = vunpack.c.l.b16 %v205
      %v568 = vunpack.c.l.b16 %v206
      %v569 = vunpack.c.l.b16 %v207
      %v570 = vunpack.c.l.b16 %v208
      %v571 = vunpack.c.l.b16 %v209
      %v572 = vunpack.c.l.b16 %v210
      %v573 = vunpack.c.l.b16 %v211
      %v574 = vunpack.c.l.b16 %v212
      %v575 = vunpack.c.l.b16 %v213
      %v576 = vunpack.c.l.b16 %v214
      %v577 = vunpack.c.l.b16 %v215
      %v578 = vunpack.c.l.b16 %v216
      %v579 = vunpack.c.l.b16 %v217
      %v580 = vunpack.c.l.b16 %v218
      %v581 = vunpack.c.l.b16 %v219
      %v582 = vunpack.c.l.b16 %v220
      %v583 = vunpack.c.l.b16 %v221
      %v584 = vunpack.c.l.b16 %v222
      %v585 = vunpack.c.l.b16 %v223
      %v586 = vunpack.c.l.b16 %v224
      %v587 = vunpack.c.l.b16 %v225
      %v588 = vunpack.c.l.b16 %v226
      %v589 = vunpack.c.l.b16 %v227
      %v590 = vunpack.c.l.b16 %v228
      %v591 = vunpack.c.l.b16 %v229
      %v592 = vunpack.c.l.b16 %v230
      %v593 = vunpack.c.l.b16 %v231
      %v594 = vunpack.c.l.b16 %v232
      %v595 = vunpack.c.l.b16 %v233
      %v596 = vunpack.c.l.b16 %v234
      %v597 = vunpack.c.l.b16 %v235
      %v598 = vunpack.c.l.b16 %v236
      %v599 = vunpack.c.l.b16 %v237
      %v600 = vunpack.c.l.b16 %v238
      %v601 = vunpack.c.l.b16 %v239
      %v602 = vunpack.c.l.b16 %v240
      %v603 = vunpack.c.l.b16 %v241
      %v604 = vunpack.c.l.b16 %v242
      %v605 = vunpack.c.l.b16 %v243
      %v606 = vunpack.c.l.b16 %v244
      %v607 = vunpack.c.l.b16 %v245
      %v608 = vunpack.c.l.b16 %v246
      %v609 = vunpack.c.l.b16 %v247
      %v610 = vunpack.c.l.b16 %v248
      %v611 = vunpack.c.l.b16 %v249
      %v612 = vunpack.c.l.b16 %v250
      %v613 = vunpack.c.l.b16 %v251
      %v614 = vunpack.c.l.b16 %v252
      %v615 = vunpack.c.l.b16 %v253
      %v616 = vunpack.c.l.b16 %v254
      %v617 = vunpack.c.l.b16 %v255
      %v618 = vunpack.c.l.b16 %v256
      %v619 = vunpack.c.l.b16 %v257
      %v620 = vunpack.c.l.b16 %v258
      %v621 = vunpack.c.l.b16 %v259
      %v622 = vunpack.c.l.b16 %v260
      %v623 = vunpack.c.l.b16 %v261
      %v624 = vunpack.c.l.b16 %v262
      %v625 = vunpack.c.l.b16 %v263
      %v626 = vunpack.c.l.b16 %v264
      %v627 = vunpack.c.l.b16 %v265
      %v628 = vunpack.c.l.b16 %v266
      %v629 = vunpack.c.l.b16 %v267
      %v630 = vunpack.c.l.b16 %v268
      %v631 = vunpack.c.l.b16 %v269
      %v632 = vunpack.c.l.b16 %v270
      %v633 = vunpack.c.l.b16 %v271
      %v634 = vunpack.c.l.b16 %v272
      %v635 = vunpack.c.l.b16 %v273
      %v636 = vunpack.c.l.b16 %v274
      %v637 = vunpack.c.l.b16 %v275
      %v638 = vunpack.c.l.b16 %v276
      %v639 = vunpack.c.l.b16 %v277
      %v640 = vunpack.c.l.b16 %v278
      %v641 = vunpack.c.l.b16 %v279
      %v642 = vunpack.c.l.b16 %v280
      %v643 = vunpack.c.l.b16 %v281
      %v644 = vunpack.c.l.b16 %v282
      %v645 = vunpack.c.l.b16 %v283
      %v646 = vunpack.c.l.b16 %v284
      %v647 = vunpack.c.l.b16 %v285
      %v648 = vunpack.c.l.b16 %v286
      %v649 = vunpack.c.l.b16 %v287
      %v650 = vunpack.c.l.b16 %v288
      %v651 = vunpack.c.l.b16 %v289
      %v652 = vunpack.c.l.b16 %v290
      %v653 = vunpack.c.l.b16 %v291
      %v654 = vunpack.c.l.b16 %v292
      %v655 = vunpack.c.l.b16 %v293
      %v656 = vunpack.c.l.b16 %v294
      %v657 = vunpack.c.l.b16 %v295
      %v658 = vunpack.c.l.b16 %v296
      %v659 = vunpack.c.l.b16 %v297
      %v660 = vunpack.c.l.b16 %v298
      %v661 = vunpack.c.l.b16 %v299
      %v662 = vunpack.c.l.b16 %v300
      %v663 = vunpack.c.l.b16 %v301
      %v664 = vunpack.c.l.b16 %v302
      %v665 = vunpack.c.l.b16 %v303
      %v666 = vunpack.c.l.b16 %v304
      %v667 = vunpack.c.l.b16 %v305
      %v668 = vunpack.c.l.b16 %v306
      %v669 = vunpack.c.l.b16 %v307
      %v670 = vunpack.c.l.b16 %v308
      %v671 = vunpack.c.l.b16 %v309
      %v672 = vunpack.c.l.b16 %v310
      %v673 = vunpack.c.l.b16 %v311
      %v674 = vunpack.c.l.b16 %v312
      %v675 = vunpack.c.l.b16 %v313
      %v676 = vunpack.c.l.b16 %v314
      %v677 = vunpack.c.l.b16 %v315
      %v678 = vunpack.c.l.b16 %v316
      %v679 = vunpack.c.l.b16 %v317
      %v680 = vunpack.c.l.b16 %v318
      %v681 = vunpack.c.l.b16 %v319
      %v682 = vunpack.c.l.b16 %v320
      %v683 = vunpack.c.l.b16 %v321
      %v684 = vunpack.c.l.b16 %v322
      %v685 = vunpack.c.l.b16 %v323
      %v686 = vunpack.c.l.b16 %v324
      %v687 = vunpack.c.l.b16 %v325
      %v688 = vunpack.c.l.b16 %v326
      %v689 = vunpack.c.l.b16 %v327
      %v690 = vunpack.c.l.b16 %v328
      %v691 = vunpack.c.l.b16 %v329
      %v692 = vunpack.c.l.b16 %v330
      %v693 = vunpack.c.l.b16 %v331
      %v694 = vunpack.c.l.b16 %v332
      %v695 = vunpack.c.l.b16 %v333
      %v696 = vunpack.c.l.b16 %v334
      %v697 = vpack.c.b16 %v538, %v537
      %v698 = vpack.c.b16 %v540, %v539
      %v699 = vpack.c.b16 %v542, %v541
      %v700 = vpack.c.b16 %v544, %v543
      %v701 = vpack.c.b16 %v546, %v545
      %v702 = vpack.c.b16 %v548, %v547
      %v703 = vpack.c.b16 %v550, %v549
      %v704 = vpack.c.b16 %v552, %v551
      %v705 = vpack.c.b16 %v554, %v553
      %v706 = vpack.c.b16 %v556, %v555
      %v707 = vpack.c.b16 %v558, %v557
      %v708 = vpack.c.b16 %v560, %v559
      %v709 = vpack.c.b16 %v562, %v561
      %v710 = vpack.c.b16 %v564, %v563
      %v711 = vpack.c.b16 %v566, %v565
      %v712 = vpack.c.b16 %v568, %v567
      %v713 = vpack.c.b16 %v570, %v569
      %v714 = vpack.c.b16 %v572, %v571
      %v715 = vpack.c.b16 %v574, %v573
      %v716 = vpack.c.b16 %v576, %v575
      %v717 = vpack.c.b16 %v578, %v577
      %v718 = vpack.c.b16 %v580, %v579
      %v719 = vpack.c.b16 %v582, %v581
      %v720 = vpack.c.b16 %v584, %v583
      %v721 = vpack.c.b16 %v586, %v585
      %v722 = vpack.c.b16 %v588, %v587
      %v723 = vpack.c.b16 %v590, %v589
      %v724 = vpack.c.b16 %v592, %v591
      %v725 = vpack.c.b16 %v594, %v593
      %v726 = vpack.c.b16 %v596, %v595
      %v727 = vpack.c.b16 %v598, %v597
      %v728 = vpack.c.b16 %v600, %v599
      %v729 = vpack.c.b16 %v602, %v601
      %v730 = vpack.c.b16 %v604, %v603
      %v731 = vpack.c.b16 %v606, %v605
      %v732 = vpack.c.b16 %v608, %v607
      %v733 = vpack.c.b16 %v610, %v609
      %v734 = vpack.c.b16 %v612, %v611
      %v735 = vpack.c.b16 %v614, %v613
      %v736 = vpack.c.b16 %v616, %v615
      %v737 = vpack.c.b16 %v618, %v617
      %v738 = vpack.c.b16 %v620, %v619
      %v739 = vpack.c.b16 %v622, %v621
      %v740 = vpack.c.b16 %v624, %v623
      %v741 = vpack.c.b16 %v626, %v625
      %v742 = vpack.c.b16 %v628, %v627
      %v743 = vpack.c.b16 %v630, %v629
      %v744 = vpack.c.b16 %v632, %v631
      %v745 = vpack.c.b16 %v634, %v633
      %v746 = vpack.c.b16 %v636, %v635
      %v747 = vpack.c.b16 %v638, %v637
      %v748 = vpack.c.b16 %v640, %v639
      %v749 = vpack.c.b16 %v642, %v641
      %v750 = vpack.c.b16 %v644, %v643
      %v751 = vpack.c.b16 %v646, %v645
      %v752 = vpack.c.b16 %v648, %v647
      %v753 = vpack.c.b16 %v650, %v649
      %v754 = vpack.c.b16 %v652, %v651
      %v755 = vpack.c.b16 %v654, %v653
      %v756 = vpack.c.b16 %v656, %v655
      %v757 = vpack.c.b16 %v658, %v657
      %v758 = vpack.c.b16 %v660, %v659
      %v759 = vpack.c.b16 %v662, %v661
      %v760 = vpack.c.b16 %v664, %v663
      %v761 = vpack.c.b16 %v666, %v665
      %v762 = vpack.c.b16 %v668, %v667
      %v763 = vpack.c.b16 %v670, %v669
      %v764 = vpack.c.b16 %v672, %v671
      %v765 = vpack.c.b16 %v674, %v673
      %v766 = vpack.c.b16 %v676, %v675
      %v767 = vpack.c.b16 %v678, %v677
      %v768 = vpack.c.b16 %v680, %v679
      %v769 = vpack.c.b16 %v682, %v681
      %v770 = vpack.c.b16 %v684, %v683
      %v771 = vpack.c.b16 %v686, %v685
      %v772 = vpack.c.b16 %v688, %v687
      %v773 = vpack.c.b16 %v690, %v689
      %v774 = vpack.c.b16 %v692, %v691
      %v775 = vpack.c.b16 %v694, %v693
      %v776 = vpack.c.b16 %v696, %v695
      %857 = vmatprep.subr.bf16.mxu0 0
      %858 = vmatpush1.bf16.msra.mxu0 %v704
      %859 = vmatprep.subr.bf16.mxu0 0
      %860 = vmatpush1.bf16.msra.mxu0 %v703
      %861 = vmatprep.subr.bf16.mxu0 0
      %862 = vmatpush1.bf16.msra.mxu0 %v702
      %863 = vmatprep.subr.bf16.mxu0 0
      %864 = vmatpush1.bf16.msra.mxu0 %v701
      %865 = vmatprep.subr.bf16.mxu0 0
      %866 = vmatpush1.bf16.msra.mxu0 %v700
      %867 = vmatprep.subr.bf16.mxu0 0
      %868 = vmatpush1.bf16.msra.mxu0 %v699
      %869 = vmatprep.subr.bf16.mxu0 0
      %870 = vmatpush1.bf16.msra.mxu0 %v698
      %871 = vmatprep.subr.bf16.mxu0 0
      %872 = vmatpush1.bf16.msra.mxu0 %v697
      %873 = vmatprep.subr.bf16.mxu0 0
      %874 = vmatpush2.bf16.msra.mxu0 %v712
      %875 = vmatprep.subr.bf16.mxu0 0
      %876 = vmatpush2.bf16.msra.mxu0 %v711
      %877 = vmatprep.subr.bf16.mxu0 0
      %878 = vmatpush2.bf16.msra.mxu0 %v710
      %879 = vmatprep.subr.bf16.mxu0 0
      %880 = vmatpush2.bf16.msra.mxu0 %v709
      %881 = vmatprep.subr.bf16.mxu0 0
      %882 = vmatpush2.bf16.msra.mxu0 %v708
      %883 = vmatprep.subr.bf16.mxu0 0
      %884 = vmatpush2.bf16.msra.mxu0 %v707
      %885 = vmatprep.subr.bf16.mxu0 0
      %886 = vmatpush2.bf16.msra.mxu0 %v706
      %887 = vmatprep.subr.bf16.mxu0 0
      %888 = vmatpush2.bf16.msra.mxu0 %v705
      %889 = vmatprep.mubr.bf16.mxu0 %v358
      %890 = vmatmul.mubr.bf16.gmra.mxu0 %v357
      %v891 = vpop.f32.mrf.mxu0
      %v892 = vadd.f32 %v340, %v891
      %v893 = vpop.f32.mrf.mxu0
      %v894 = vpop.f32.mrf.mxu0
      %v895 = vpop.f32.mrf.mxu0
      %896 = vdwg.mxu0
      %897 = vmatprep.subr.bf16.mxu0 0
      %898 = vmatpush1.bf16.msra.mxu0 %v720
      %899 = vmatprep.subr.bf16.mxu0 0
      %900 = vmatpush1.bf16.msra.mxu0 %v719
      %901 = vmatprep.subr.bf16.mxu0 0
      %902 = vmatpush1.bf16.msra.mxu0 %v718
      %903 = vmatprep.subr.bf16.mxu0 0
      %904 = vmatpush1.bf16.msra.mxu0 %v717
      %905 = vmatprep.subr.bf16.mxu0 0
      %906 = vmatpush1.bf16.msra.mxu0 %v716
      %907 = vmatprep.subr.bf16.mxu0 0
      %908 = vmatpush1.bf16.msra.mxu0 %v715
      %909 = vmatprep.subr.bf16.mxu0 0
      %910 = vmatpush1.bf16.msra.mxu0 %v714
      %911 = vmatprep.subr.bf16.mxu0 0
      %912 = vmatpush1.bf16.msra.mxu0 %v713
      %913 = vmatprep.subr.bf16.mxu0 0
      %914 = vmatpush2.bf16.msra.mxu0 %v728
      %915 = vmatprep.subr.bf16.mxu0 0
      %916 = vmatpush2.bf16.msra.mxu0 %v727
      %917 = vmatprep.subr.bf16.mxu0 0
      %918 = vmatpush2.bf16.msra.mxu0 %v726
      %919 = vmatprep.subr.bf16.mxu0 0
      %920 = vmatpush2.bf16.msra.mxu0 %v725
      %921 = vmatprep.subr.bf16.mxu0 0
      %922 = vmatpush2.bf16.msra.mxu0 %v724
      %923 = vmatprep.subr.bf16.mxu0 0
      %924 = vmatpush2.bf16.msra.mxu0 %v723
      %925 = vmatprep.subr.bf16.mxu0 0
      %926 = vmatpush2.bf16.msra.mxu0 %v722
      %927 = vmatprep.subr.bf16.mxu0 0
      %928 = vmatpush2.bf16.msra.mxu0 %v721
      %929 = vmatprep.mubr.bf16.mxu0 %v360
      %930 = vmatmul.mubr.bf16.gmra.mxu0 %v359
      %v931 = vpop.f32.mrf.mxu0
      %v932 = vadd.f32 %v892, %v931
      %v933 = vpop.f32.mrf.mxu0
      %v934 = vpop.f32.mrf.mxu0
      %v935 = vpop.f32.mrf.mxu0
      %936 = vdwg.mxu0
      %937 = vmatprep.subr.bf16.mxu0 0
      %938 = vmatpush1.bf16.msra.mxu0 %v736
      %939 = vmatprep.subr.bf16.mxu0 0
      %940 = vmatpush1.bf16.msra.mxu0 %v735
      %941 = vmatprep.subr.bf16.mxu0 0
      %942 = vmatpush1.bf16.msra.mxu0 %v734
      %943 = vmatprep.subr.bf16.mxu0 0
      %944 = vmatpush1.bf16.msra.mxu0 %v733
      %945 = vmatprep.subr.bf16.mxu0 0
      %946 = vmatpush1.bf16.msra.mxu0 %v732
      %947 = vmatprep.subr.bf16.mxu0 0
      %948 = vmatpush1.bf16.msra.mxu0 %v731
      %949 = vmatprep.subr.bf16.mxu0 0
      %950 = vmatpush1.bf16.msra.mxu0 %v730
      %951 = vmatprep.subr.bf16.mxu0 0
      %952 = vmatpush1.bf16.msra.mxu0 %v729
      %953 = vmatprep.subr.bf16.mxu0 0
      %954 = vmatpush2.bf16.msra.mxu0 %v744
      %955 = vmatprep.subr.bf16.mxu0 0
      %956 = vmatpush2.bf16.msra.mxu0 %v743
      %957 = vmatprep.subr.bf16.mxu0 0
      %958 = vmatpush2.bf16.msra.mxu0 %v742
      %959 = vmatprep.subr.bf16.mxu0 0
      %960 = vmatpush2.bf16.msra.mxu0 %v741
      %961 = vmatprep.subr.bf16.mxu0 0
      %962 = vmatpush2.bf16.msra.mxu0 %v740
      %963 = vmatprep.subr.bf16.mxu0 0
      %964 = vmatpush2.bf16.msra.mxu0 %v739
      %965 = vmatprep.subr.bf16.mxu0 0
      %966 = vmatpush2.bf16.msra.mxu0 %v738
      %967 = vmatprep.subr.bf16.mxu0 0
      %968 = vmatpush2.bf16.msra.mxu0 %v737
      %969 = vmatprep.mubr.bf16.mxu0 %v362
      %970 = vmatmul.mubr.bf16.gmra.mxu0 %v361
      %v971 = vpop.f32.mrf.mxu0
      %v972 = vadd.f32 %v932, %v971
      %v973 = vpop.f32.mrf.mxu0
      %v974 = vpop.f32.mrf.mxu0
      %v975 = vpop.f32.mrf.mxu0
      %976 = vdwg.mxu0
      %977 = vmatprep.subr.bf16.mxu0 0
      %978 = vmatpush1.bf16.msra.mxu0 %v752
      %979 = vmatprep.subr.bf16.mxu0 0
      %980 = vmatpush1.bf16.msra.mxu0 %v751
      %981 = vmatprep.subr.bf16.mxu0 0
      %982 = vmatpush1.bf16.msra.mxu0 %v750
      %983 = vmatprep.subr.bf16.mxu0 0
      %984 = vmatpush1.bf16.msra.mxu0 %v749
      %985 = vmatprep.subr.bf16.mxu0 0
      %986 = vmatpush1.bf16.msra.mxu0 %v748
      %987 = vmatprep.subr.bf16.mxu0 0
      %988 = vmatpush1.bf16.msra.mxu0 %v747
      %989 = vmatprep.subr.bf16.mxu0 0
      %990 = vmatpush1.bf16.msra.mxu0 %v746
      %991 = vmatprep.subr.bf16.mxu0 0
      %992 = vmatpush1.bf16.msra.mxu0 %v745
      %993 = vmatprep.subr.bf16.mxu0 0
      %994 = vmatpush2.bf16.msra.mxu0 %v760
      %995 = vmatprep.subr.bf16.mxu0 0
      %996 = vmatpush2.bf16.msra.mxu0 %v759
      %997 = vmatprep.subr.bf16.mxu0 0
      %998 = vmatpush2.bf16.msra.mxu0 %v758
      %999 = vmatprep.subr.bf16.mxu0 0
      %1000 = vmatpush2.bf16.msra.mxu0 %v757
      %1001 = vmatprep.subr.bf16.mxu0 0
      %1002 = vmatpush2.bf16.msra.mxu0 %v756
      %1003 = vmatprep.subr.bf16.mxu0 0
      %1004 = vmatpush2.bf16.msra.mxu0 %v755
      %1005 = vmatprep.subr.bf16.mxu0 0
      %1006 = vmatpush2.bf16.msra.mxu0 %v754
      %1007 = vmatprep.subr.bf16.mxu0 0
      %1008 = vmatpush2.bf16.msra.mxu0 %v753
      %1009 = vmatprep.mubr.bf16.mxu0 %v364
      %1010 = vmatmul.mubr.bf16.gmra.mxu0 %v363
      %v1011 = vpop.f32.mrf.mxu0
      %v1012 = vadd.f32 %v972, %v1011
      %v1013 = vpop.f32.mrf.mxu0
      %v1014 = vpop.f32.mrf.mxu0
      %v1015 = vpop.f32.mrf.mxu0
      %1016 = vdwg.mxu0
      %1017 = vmatprep.subr.bf16.mxu0 0
      %1018 = vmatpush1.bf16.msra.mxu0 %v768
      %1019 = vmatprep.subr.bf16.mxu0 0
      %1020 = vmatpush1.bf16.msra.mxu0 %v767
      %1021 = vmatprep.subr.bf16.mxu0 0
      %1022 = vmatpush1.bf16.msra.mxu0 %v766
      %1023 = vmatprep.subr.bf16.mxu0 0
      %1024 = vmatpush1.bf16.msra.mxu0 %v765
      %1025 = vmatprep.subr.bf16.mxu0 0
      %1026 = vmatpush1.bf16.msra.mxu0 %v764
      %1027 = vmatprep.subr.bf16.mxu0 0
      %1028 = vmatpush1.bf16.msra.mxu0 %v763
      %1029 = vmatprep.subr.bf16.mxu0 0
      %1030 = vmatpush1.bf16.msra.mxu0 %v762
      %1031 = vmatprep.subr.bf16.mxu0 0
      %1032 = vmatpush1.bf16.msra.mxu0 %v761
      %1033 = vmatprep.subr.bf16.mxu0 0
      %1034 = vmatpush2.bf16.msra.mxu0 %v776
      %1035 = vmatprep.subr.bf16.mxu0 0
      %1036 = vmatpush2.bf16.msra.mxu0 %v775
      %1037 = vmatprep.subr.bf16.mxu0 0
      %1038 = vmatpush2.bf16.msra.mxu0 %v774
      %1039 = vmatprep.subr.bf16.mxu0 0
      %1040 = vmatpush2.bf16.msra.mxu0 %v773
      %1041 = vmatprep.subr.bf16.mxu0 0
      %1042 = vmatpush2.bf16.msra.mxu0 %v772
      %1043 = vmatprep.subr.bf16.mxu0 0
      %1044 = vmatpush2.bf16.msra.mxu0 %v771
      %1045 = vmatprep.subr.bf16.mxu0 0
      %1046 = vmatpush2.bf16.msra.mxu0 %v770
      %1047 = vmatprep.subr.bf16.mxu0 0
      %1048 = vmatpush2.bf16.msra.mxu0 %v769
      %1049 = vmatprep.mubr.bf16.mxu0 %v366
      %1050 = vmatmul.mubr.bf16.gmra.mxu0 %v365
      %v1051 = vpop.f32.mrf.mxu0
      %v1052 = vadd.f32 %v1012, %v1051
      %v1053 = vpop.f32.mrf.mxu0
      %v1054 = vpop.f32.mrf.mxu0
      %v1055 = vpop.f32.mrf.mxu0
      %1056 = vdwg.mxu0
      %vm1057 = vcmask 31744
      %1058 = vst.msk [vmem:[%s168] sm:$0xff] %vm1057, %v1052
      %p1059 = scmp.lt.s32.totalorder %s14, 1
      %s1060 = scalar_select %p1059, %s14, 1
      %s1061 = smul.addr %s1060, 8
      %s1062 = scalar_lea.vmem %s3, %s1061
      // Predicated region
      $region33: #{tpu_custom_call.1} parent=31 // pred_check
        %p1063 = pneg %p100
      $region34: #{tpu_custom_call.1} parent=31 // pred_check_branch
        %1065 = sbr.rel (%p1063) target = $region36
      $region35: #{tpu_custom_call.1} parent=31 // pred_region
        _
      $region36: #{tpu_custom_call.1} parent=31 // pred_fallthru
        _
    $region32: #{tpu_custom_call.1} parent=5 // pred_fallthru
      _
    %p1066 = scmp.le.s32.totalorder 2, %s9
    // Predicated region
    $region37: #{tpu_custom_call.1} parent=5 // pred_check
      %p1067 = pneg %p1066
    $region38: #{tpu_custom_call.1} parent=5 // pred_check_branch
      %1069 = sbr.rel (%p1067) target = $region40
    $region39: #{tpu_custom_call.1} parent=5 // pred_region
      %s1070 = ssub.s32 %s9, 2
      // Predicated region
      $region41: #{tpu_custom_call.1} parent=39 // pred_check
        %p1071 = pneg %p106
      $region42: #{tpu_custom_call.1} parent=39 // pred_check_branch
        %1073 = sbr.rel (%p1071) target = $region44
      $region43: #{tpu_custom_call.1} parent=39 // pred_region
        %p1074 = scmp.lt.s32.totalorder %s15, 1
        %s1075 = scalar_select %p1074, %s15, 1
        %s1076 = smul.addr %s1075, 8
        %s1077 = scalar_lea.vmem %s3, %s1076
      $region44: #{tpu_custom_call.1} parent=39 // pred_fallthru
        _
    $region40: #{tpu_custom_call.1} parent=5 // pred_fallthru
      _
  $region6: #{tpu_custom_call.1} parent=0 // loop_footer
    %s13 = sadd.s32 1, %s9
  $region7: #{tpu_custom_call.1} parent=0 // loop_footer_branch
    %8 = sbr.rel target = $region3
  $region8: #{tpu_custom_call.1} parent=0 // loop_exit
    _

</llo_original>
